<compile_context>
chip_gen: v7x
topology: tpu7x:2x2x1
jax: 0.10.0
libtpu: 0.0.40
codegen_flags: <defaults>
</compile_context>

<pallas_src>
import functools

import jax
import jax.numpy as jnp
import numpy as np
from jax.experimental import pallas as pl
from jax.experimental.pallas import tpu as pltpu


def _round_up(x, m):
    return ((x + m - 1) // m) * m


def _convblock_kernel(xw_ref, w1_ref, b1_ref, w2_ref, b2_ref, o_ref, *, K, L, TL):
    """One (batch, length-tile) pair per grid step.

    xw_ref: (1, 1, Cin, TL + 4*pad)  input tile + halo (zero outside [0, L))
    w1_ref: (Cout, K*Cin)            conv1 weight, taps folded into contraction
    b1_ref: (Cout, 1)
    w2_ref: (Cout, K*Cout)           conv2 weight, taps folded
    b2_ref: (Cout, 1)
    o_ref:  (1, Cout, TL)            output tile (length on lanes -> lane dense)
    """
    pad = K // 2
    R = TL + 2 * pad                      # conv1 is recomputed over the halo
    j = pl.program_id(1)

    xw = xw_ref[0, 0]                     # (Cin, TL + 4*pad)

    # ---- conv1 (+bias, ReLU), single folded-K matmul ----------------------
    # win1[k*Cin + c, t] = x[c, global(t) - pad + k],  t in [0, R)
    win1 = jnp.concatenate([xw[:, k:k + R] for k in range(K)], axis=0)
    h = jnp.dot(w1_ref[...], win1, preferred_element_type=jnp.float32)
    h = jnp.maximum(h + b1_ref[...], 0.0)                         # (Cout, R)

    # Zero h at positions outside the real signal [0, L): reproduces conv2's
    # zero padding at global edges and handles the ragged last tile.
    gpos = j * TL - pad + jax.lax.broadcasted_iota(jnp.int32, (1, R), 1)
    h = jnp.where((gpos >= 0) & (gpos < L), h, 0.0)

    # ---- conv2 (+bias, ReLU), single folded-K matmul ----------------------
    # win2[k*Cout + c, t] = h[c, t + k],  t in [0, TL)
    win2 = jnp.concatenate([h[:, k:k + TL] for k in range(K)], axis=0)
    y = jnp.dot(w2_ref[...], win2, preferred_element_type=jnp.float32)
    y = jnp.maximum(y + b2_ref[...], 0.0)                         # (Cout, TL)

    # dropout (eval mode) == identity
    o_ref[0] = y.astype(o_ref.dtype)


def conv_block(x_ncl, w1, b1, w2, b2, *, tile_l=512):
    """ConvBlock forward (eval mode).

    x_ncl: (N, Cin, L)      -- PyTorch Conv1d layout
    w1:    (Cout, Cin, K)   -- PyTorch nn.Conv1d weight layout
    b1:    (Cout,)
    w2:    (Cout, Cout, K)
    b2:    (Cout,)
    returns (N, Cout, L)
    """
    N, cin, L = x_ncl.shape
    cout, cin_w, K = w1.shape
    assert cin_w == cin and w2.shape == (cout, cout, K)
    pad = K // 2

    # Length tile: multiple of 128 lanes, capped at tile_l, covering L.
    TL = _round_up(min(tile_l, _round_up(L, 128)), 128)
    nT = pl.cdiv(L, TL)
    Lr = nT * TL
    TLw = TL + 4 * pad
    dtype = jnp.float32

    # Zero-extend x outside [0, L) and materialize per-tile overlapping windows
    # (halo = 2*pad per side). Duplication is only 4*pad/TL (<2% for K=3, TL>=256).
    xz = jnp.pad(x_ncl.astype(dtype),
                 ((0, 0), (0, 0), (2 * pad, (Lr - L) + 2 * pad)))
    x_win = jnp.stack([xz[:, :, j * TL: j * TL + TLw] for j in range(nT)], axis=1)

    # Fold the K taps into the contraction: w[o, c, k] -> w_flat[o, k*C + c].
    w1_flat = jnp.transpose(w1.astype(dtype), (0, 2, 1)).reshape(cout, K * cin)
    w2_flat = jnp.transpose(w2.astype(dtype), (0, 2, 1)).reshape(cout, K * cout)
    b1_2d = b1.reshape(cout, 1).astype(jnp.float32)
    b2_2d = b2.reshape(cout, 1).astype(jnp.float32)

    out = pl.pallas_call(
        functools.partial(_convblock_kernel, K=K, L=L, TL=TL),
        out_shape=jax.ShapeDtypeStruct((N, cout, Lr), jnp.float32),
        grid_spec=pltpu.PrefetchScalarGridSpec(
            num_scalar_prefetch=0,
            grid=(N, nT),
            in_specs=[
                pl.BlockSpec((1, 1, cin, TLw), lambda n, j: (n, j, 0, 0)),
                pl.BlockSpec((cout, K * cin), lambda n, j: (0, 0)),
                pl.BlockSpec((cout, 1), lambda n, j: (0, 0)),
                pl.BlockSpec((cout, K * cout), lambda n, j: (0, 0)),
                pl.BlockSpec((cout, 1), lambda n, j: (0, 0)),
            ],
            out_specs=pl.BlockSpec((1, cout, TL), lambda n, j: (n, 0, j)),
        ),
        compiler_params=pltpu.CompilerParams(
            dimension_semantics=("parallel", "parallel"),
            vmem_limit_bytes=48 * 1024 * 1024,   # headroom under v7x's 64 MiB
        ),
    )(x_win, w1_flat, b1_2d, w2_flat, b2_2d)

    return out[:, :, :L] if Lr != L else out


def _ref_conv_block(x_ncl, w1, b1, w2, b2):
    """Plain-JAX reference (nn.Conv1d 'same' padding + ReLU, twice; eval dropout)."""
    cout, cin, K = w1.shape
    pad = K // 2
    x = jnp.transpose(x_ncl, (0, 2, 1))           # NLC
    L = x.shape[1]
    w1_klo = jnp.transpose(w1, (2, 1, 0))         # (K, Cin, Cout)
    w2_klo = jnp.transpose(w2, (2, 1, 0))         # (K, Cout, Cout)

    xp = jnp.pad(x, ((0, 0), (pad, pad), (0, 0)))
    h = sum(jnp.einsum('nlc,co->nlo', xp[:, k:k + L, :], w1_klo[k])
            for k in range(K)) + b1
    h = jnp.maximum(h, 0.0)

    hp = jnp.pad(h, ((0, 0), (pad, pad), (0, 0)))
    y = sum(jnp.einsum('nlc,co->nlo', hp[:, k:k + L, :], w2_klo[k])
            for k in range(K)) + b2
    y = jnp.maximum(y, 0.0)
    return jnp.transpose(y, (0, 2, 1))


if __name__ == "__main__":
    # Small shapes: batch=2, in_channels=4, out_channels=8, length=16, kernel=3
    N, CIN, COUT, L, K = 2, 4, 8, 16, 3

    key = jax.random.PRNGKey(0)
    kx, kw1, kb1, kw2, kb2 = jax.random.split(key, 5)

    x = jax.random.normal(kx, (N, CIN, L), dtype=jnp.float32)

    # Deterministic synthetic parameters, PyTorch nn.Conv1d layout (Cout, Cin, K).
    bound1 = 1.0 / np.sqrt(CIN * K)
    bound2 = 1.0 / np.sqrt(COUT * K)
    w1 = jax.random.uniform(kw1, (COUT, CIN, K), jnp.float32, -bound1, bound1)
    b1 = jax.random.uniform(kb1, (COUT,), jnp.float32, -bound1, bound1)
    w2 = jax.random.uniform(kw2, (COUT, COUT, K), jnp.float32, -bound2, bound2)
    b2 = jax.random.uniform(kb2, (COUT,), jnp.float32, -bound2, bound2)

    out = jax.block_until_ready(conv_block(x, w1, b1, w2, b2))
    ref = _ref_conv_block(x, w1, b1, w2, b2)
    np.testing.assert_allclose(np.asarray(out), np.asarray(ref), rtol=1e-5, atol=1e-5)

    print("KERNEL_OK")
</pallas_src>

<mosaic_0001>
module attributes {stable_mosaic.version = 11 : i64} {
  func.func @_convblock_kernel(%arg0: i32, %arg1: i32, %arg2: memref<1x1x4x132xf32, #tpu.memory_space<vmem>>, %arg3: memref<8x12xf32, #tpu.memory_space<vmem>>, %arg4: memref<8x1xf32, #tpu.memory_space<vmem>>, %arg5: memref<8x24xf32, #tpu.memory_space<vmem>>, %arg6: memref<8x1xf32, #tpu.memory_space<vmem>>, %arg7: memref<1x8x128xf32, #tpu.memory_space<vmem>>) attributes {dimension_semantics = [#tpu.dimension_semantics<parallel>, #tpu.dimension_semantics<parallel>], iteration_bounds = array<i64: 2, 1>, scalar_prefetch = 0 : i64, scratch_operands = 0 : i64, tpu.core_type = #tpu.core_type<tc>, window_params = [{transform_indices = @transform_0, window_bounds = array<i64: 1, 1, 4, 132>}, {pipeline_mode = #tpu.pipeline_mode<synchronous>, transform_indices = @transform_1, window_bounds = array<i64: 8, 12>}, {pipeline_mode = #tpu.pipeline_mode<synchronous>, transform_indices = @transform_2, window_bounds = array<i64: 8, 1>}, {pipeline_mode = #tpu.pipeline_mode<synchronous>, transform_indices = @transform_3, window_bounds = array<i64: 8, 24>}, {pipeline_mode = #tpu.pipeline_mode<synchronous>, transform_indices = @transform_4, window_bounds = array<i64: 8, 1>}, {transform_indices = @transform_5, window_bounds = array<i64: 1, 8, 128>}]} {
    %c0 = arith.constant 0 : index
    %c0_0 = arith.constant 0 : index
    %c0_1 = arith.constant 0 : index
    %c0_2 = arith.constant 0 : index
    %0 = vector.load %arg2[%c0, %c0_0, %c0_1, %c0_2] : memref<1x1x4x132xf32, #tpu.memory_space<vmem>>, vector<1x1x4x132xf32>
    %1 = vector.shape_cast %0 : vector<1x1x4x132xf32> to vector<4x132xf32>
    %2 = vector.extract_strided_slice %1 {offsets = [0, 0], sizes = [4, 130], strides = [1, 1]} : vector<4x132xf32> to vector<4x130xf32>
    %3 = vector.extract_strided_slice %1 {offsets = [0, 1], sizes = [4, 130], strides = [1, 1]} : vector<4x132xf32> to vector<4x130xf32>
    %4 = vector.extract_strided_slice %1 {offsets = [0, 2], sizes = [4, 130], strides = [1, 1]} : vector<4x132xf32> to vector<4x130xf32>
    %5 = tpu.concatenate %2, %3, %4 in 0 : vector<4x130xf32>, vector<4x130xf32>, vector<4x130xf32> -> vector<12x130xf32>
    %c0_3 = arith.constant 0 : index
    %c0_4 = arith.constant 0 : index
    %6 = vector.load %arg3[%c0_3, %c0_4] : memref<8x12xf32, #tpu.memory_space<vmem>>, vector<8x12xf32>
    %cst = arith.constant dense<0.000000e+00> : vector<8x130xf32>
    %7 = tpu.matmul %6, %5, %cst {dimension_numbers = #tpu.dot_dimension_numbers<[1], [0], [0], [1], [0, 0, 1, 1], [], []>} : vector<8x12xf32>, vector<12x130xf32>, vector<8x130xf32> -> vector<8x130xf32>
    %c0_5 = arith.constant 0 : index
    %c0_6 = arith.constant 0 : index
    %8 = vector.load %arg4[%c0_5, %c0_6] : memref<8x1xf32, #tpu.memory_space<vmem>>, vector<8x1xf32>
    %9 = vector.broadcast %8 : vector<8x1xf32> to vector<8x130xf32>
    %10 = arith.addf %7, %9 : vector<8x130xf32>
    %cst_7 = arith.constant 0.000000e+00 : f32
    %11 = vector.broadcast %cst_7 : f32 to vector<8x130xf32>
    %12 = arith.maximumf %10, %11 : vector<8x130xf32>
    %c128_i32 = arith.constant 128 : i32
    %13 = arith.muli %arg1, %c128_i32 : i32
    %c1_i32 = arith.constant 1 : i32
    %14 = arith.subi %13, %c1_i32 : i32
    %15 = tpu.iota {dimensions = array<i32: 1>} : vector<1x130xi32>
    %16 = vector.broadcast %14 : i32 to vector<1x130xi32>
    %17 = arith.addi %16, %15 : vector<1x130xi32>
    %c0_i32 = arith.constant 0 : i32
    %18 = vector.broadcast %c0_i32 : i32 to vector<1x130xi32>
    %19 = arith.cmpi sge, %17, %18 : vector<1x130xi32>
    %c16_i32 = arith.constant 16 : i32
    %20 = vector.broadcast %c16_i32 : i32 to vector<1x130xi32>
    %21 = arith.cmpi slt, %17, %20 : vector<1x130xi32>
    %22 = arith.andi %19, %21 : vector<1x130xi1>
    %cst_8 = arith.constant 0.000000e+00 : f32
    %23 = vector.shape_cast %22 : vector<1x130xi1> to vector<1x130xi1>
    %24 = vector.broadcast %23 : vector<1x130xi1> to vector<8x130xi1>
    %25 = vector.broadcast %cst_8 : f32 to vector<8x130xf32>
    %26 = arith.select %24, %12, %25 : vector<8x130xi1>, vector<8x130xf32>
    %27 = vector.extract_strided_slice %26 {offsets = [0, 0], sizes = [8, 128], strides = [1, 1]} : vector<8x130xf32> to vector<8x128xf32>
    %28 = vector.extract_strided_slice %26 {offsets = [0, 1], sizes = [8, 128], strides = [1, 1]} : vector<8x130xf32> to vector<8x128xf32>
    %29 = vector.extract_strided_slice %26 {offsets = [0, 2], sizes = [8, 128], strides = [1, 1]} : vector<8x130xf32> to vector<8x128xf32>
    %30 = tpu.concatenate %27, %28, %29 in 0 : vector<8x128xf32>, vector<8x128xf32>, vector<8x128xf32> -> vector<24x128xf32>
    %c0_9 = arith.constant 0 : index
    %c0_10 = arith.constant 0 : index
    %31 = vector.load %arg5[%c0_9, %c0_10] : memref<8x24xf32, #tpu.memory_space<vmem>>, vector<8x24xf32>
    %cst_11 = arith.constant dense<0.000000e+00> : vector<8x128xf32>
    %32 = tpu.matmul %31, %30, %cst_11 {dimension_numbers = #tpu.dot_dimension_numbers<[1], [0], [0], [1], [0, 0, 1, 1], [], []>} : vector<8x24xf32>, vector<24x128xf32>, vector<8x128xf32> -> vector<8x128xf32>
    %c0_12 = arith.constant 0 : index
    %c0_13 = arith.constant 0 : index
    %33 = vector.load %arg6[%c0_12, %c0_13] : memref<8x1xf32, #tpu.memory_space<vmem>>, vector<8x1xf32>
    %34 = vector.broadcast %33 : vector<8x1xf32> to vector<8x128xf32>
    %35 = arith.addf %32, %34 : vector<8x128xf32>
    %cst_14 = arith.constant 0.000000e+00 : f32
    %36 = vector.broadcast %cst_14 : f32 to vector<8x128xf32>
    %37 = arith.maximumf %35, %36 : vector<8x128xf32>
    %c0_15 = arith.constant 0 : index
    %c0_16 = arith.constant 0 : index
    %c0_17 = arith.constant 0 : index
    %38 = vector.load %arg7[%c0_15, %c0_16, %c0_17] : memref<1x8x128xf32, #tpu.memory_space<vmem>>, vector<1x8x128xf32>
    %39 = vector.shape_cast %38 : vector<1x8x128xf32> to vector<8x128xf32>
    %40 = vector.shape_cast %37 : vector<8x128xf32> to vector<1x8x128xf32>
    tpu.vector_store %arg7[%c0_15, %c0_16, %c0_17], %40 {strides = array<i32>} : memref<1x8x128xf32, #tpu.memory_space<vmem>>, vector<1x8x128xf32>,
    return
  }
  func.func @transform_0(%arg0: i32, %arg1: i32) -> (i32, i32, i32, i32) {
    %c0_i32 = arith.constant 0 : i32
    %c0_i32_0 = arith.constant 0 : i32
    %c0_i32_1 = arith.constant 0 : i32
    return %arg0, %arg1, %c0_i32, %c0_i32_0 : i32, i32, i32, i32
  }
  func.func @transform_1(%arg0: i32, %arg1: i32) -> (i32, i32) {
    %c0_i32 = arith.constant 0 : i32
    %c0_i32_0 = arith.constant 0 : i32
    %c0_i32_1 = arith.constant 0 : i32
    return %c0_i32, %c0_i32_0 : i32, i32
  }
  func.func @transform_2(%arg0: i32, %arg1: i32) -> (i32, i32) {
    %c0_i32 = arith.constant 0 : i32
    %c0_i32_0 = arith.constant 0 : i32
    %c0_i32_1 = arith.constant 0 : i32
    return %c0_i32, %c0_i32_0 : i32, i32
  }
  func.func @transform_3(%arg0: i32, %arg1: i32) -> (i32, i32) {
    %c0_i32 = arith.constant 0 : i32
    %c0_i32_0 = arith.constant 0 : i32
    %c0_i32_1 = arith.constant 0 : i32
    return %c0_i32, %c0_i32_0 : i32, i32
  }
  func.func @transform_4(%arg0: i32, %arg1: i32) -> (i32, i32) {
    %c0_i32 = arith.constant 0 : i32
    %c0_i32_0 = arith.constant 0 : i32
    %c0_i32_1 = arith.constant 0 : i32
    return %c0_i32, %c0_i32_0 : i32, i32
  }
  func.func @transform_5(%arg0: i32, %arg1: i32) -> (i32, i32, i32) {
    %c0_i32 = arith.constant 0 : i32
    %c0_i32_0 = arith.constant 0 : i32
    return %arg0, %c0_i32, %arg1 : i32, i32, i32
  }
}

</mosaic_0001>

<llo_original>
// kernel: tpu_custom_call.1
$region0: #{tpu_custom_call.1}
  #allocation0 [shape = 'u32[]', space=smem, size = 0x4, offset = 0x4, fixed_abs, tag = 'smem constant byte address 0x4 - core index']
  #allocation1 [shape = 'u32[144,128]{1,0:T(1,128)}', space=vmem, size = 0x12000, scoped, tag = 'internal scratch']
  %s0 = inlined_call_operand.vmem [shape: f32[2,1,4,132], index: 0, kind: input, shape index: {}]
  %s1 = inlined_call_operand.hbm [shape: f32[8,12], index: 1, kind: input, shape index: {}]
  %s2 = inlined_call_operand.vmem [shape: f32[8,1], index: 2, kind: input, shape index: {}]
  %s3 = inlined_call_operand.vmem [shape: f32[8,24], index: 3, kind: input, shape index: {}]
  %s4 = inlined_call_operand.vmem [shape: f32[8,1], index: 4, kind: input, shape index: {}]
  %s5 = inlined_call_operand.hbm [shape: f32[2,8,128], index: 5, kind: output, shape index: {}]
  %s6 = sld [smem:[#allocation0]]
  $region57: #{tpu_custom_call.1} parent=0
    _
  %s8 = ssub.s32 1, %s6
  %s9 = scalar_select 0, %s8, %s6
  $region1: #{tpu_custom_call.1} parent=0
    #allocation2 [shape = 'u8[4096]{0}', space=vmem, size = 0x1000, scoped, tag = 'input window, operand 1, single buffered']
    #allocation3 [shape = 's32[2]{0}', space=sflag, size = 0x8, scoped, tag = 'scoped memory for tpu_custom_call.1']
    #allocation4 [shape = 's32[2]{0}', space=sflag, size = 0x8, scoped, tag = 'scoped memory for tpu_custom_call.1']
    #allocation5 [shape = 'u8[8192]{0}', space=vmem, size = 0x2000, scoped, tag = 'output window, operand 0']
    %10 = vsyncpa [#allocation3], 0
    %11 = vsyncpa [#allocation4], 0
    %s12 = scalar_lea.sflag [#allocation4], 1
    %13 = vsyncpa %s12, 0
    loop: start=0, step=1, limit=4
    $region2: #{tpu_custom_call.1} parent=1 // loop_pre_header
      _
    $region3: #{tpu_custom_call.1} parent=1 // loop_header
      %s15 = sphi 0, %s19
      %p16 = scmp.ge.s32.totalorder %s15, 4
      %s22 = sphi 0, %s34
      %s23 = sphi 0, %s30
      %s24 = sphi 0, %s22
      %s25 = sphi 0, %s23
      %s26 = sphi 0, %s24
      %s27 = sphi 0, %s25
      %s39 = sphi 0, %s41
      %s42 = sphi 0, %s39
      %s43 = sphi 0, %s42
      %s59 = sphi 0, %s43
      %s63 = sphi 0, %s63
      %s65 = sphi 0, %s63
      %s66 = sphi 0, %s65
      %s80 = sphi 0, %s66
      %s84 = sphi 0, %s84
      %s86 = sphi 0, %s84
      %s87 = sphi 0, %s86
      %s101 = sphi 0, %s87
      %s105 = sphi 0, %s105
      %s107 = sphi 0, %s105
      %s108 = sphi 0, %s107
      %s122 = sphi 0, %s108
      %s126 = sphi 0, %s126
      %s128 = sphi 0, %s126
      %s129 = sphi 0, %s128
      %s143 = sphi 0, %s129
      %s151 = sphi 0, %s153
      %s154 = sphi 0, %s151
      %s155 = sphi 0, %s154
      %s171 = sphi 0, %s155
    $region4: #{tpu_custom_call.1} parent=1 // loop_header_branch
      %18 = sbr.rel (%p16) target = $region8
    $region5: #{tpu_custom_call.1} parent=1 // loop_body
      %s20 = ssub.s32 %s15, 1
      %s21 = ssub.s32 %s15, 2
      %s28 = sadd.s32 1, %s23
      %p29 = scmp.ge.s32.totalorder %s28, 1
      %s30 = scalar_select %p29, 0, %s28
      %s31 = sadd.s32 1, %s22
      %s32 = scalar_select %p29, %s31, %s22
      %p33 = scmp.ge.s32.totalorder %s32, 2
      %s34 = scalar_select %p33, 0, %s32
      %s35 = ssub.s32 %s22, %s34
      %s36 = ssub.s32 %s23, %s30
      %s37 = sor.u32 %s35, %s36
      %p38 = scmp.eq.s32.totalorder %s37, 0
      %s40 = sadd.s32 %s39, 1
      %s41 = scalar_select %p38, %s39, %s40
      %p44 = pneg %p38
      %p45 = scmp.eq.s32.totalorder %s15, 1
      %p46 = por %p44, %p45
      %p47 = scmp.ne.s32.totalorder %s39, %s42
      %p48 = scmp.eq.s32.totalorder %s15, 0
      %p49 = por %p47, %p48
      %p50 = scmp.ne.s32.totalorder %s39, %s42
      %p51 = scmp.eq.s32.totalorder %s20, 1
      %p52 = por %p50, %p51
      %p53 = scmp.ne.s32.totalorder %s42, %s43
      %p54 = scmp.eq.s32.totalorder %s20, 0
      %p55 = por %p53, %p54
      %p56 = scmp.ne.s32.totalorder %s42, %s43
      %p57 = scmp.eq.s32.totalorder %s21, 1
      %p58 = por %p56, %p57
      %p60 = scmp.ne.s32.totalorder %s43, %s59
      %p61 = scmp.eq.s32.totalorder %s21, 0
      %p62 = por %p60, %p61
      %s64 = sadd.s32 %s63, 1
      %p67 = scmp.eq.s32.totalorder %s15, 1
      %p68 = scmp.ne.s32.totalorder %s63, %s65
      %p69 = scmp.eq.s32.totalorder %s15, 0
      %p70 = por %p68, %p69
      %p71 = scmp.ne.s32.totalorder %s63, %s65
      %p72 = scmp.eq.s32.totalorder %s20, 1
      %p73 = por %p71, %p72
      %p74 = scmp.ne.s32.totalorder %s65, %s66
      %p75 = scmp.eq.s32.totalorder %s20, 0
      %p76 = por %p74, %p75
      %p77 = scmp.ne.s32.totalorder %s65, %s66
      %p78 = scmp.eq.s32.totalorder %s21, 1
      %p79 = por %p77, %p78
      %p81 = scmp.ne.s32.totalorder %s66, %s80
      %p82 = scmp.eq.s32.totalorder %s21, 0
      %p83 = por %p81, %p82
      %s85 = sadd.s32 %s84, 1
      %p88 = scmp.eq.s32.totalorder %s15, 1
      %p89 = scmp.ne.s32.totalorder %s84, %s86
      %p90 = scmp.eq.s32.totalorder %s15, 0
      %p91 = por %p89, %p90
      %p92 = scmp.ne.s32.totalorder %s84, %s86
      %p93 = scmp.eq.s32.totalorder %s20, 1
      %p94 = por %p92, %p93
      %p95 = scmp.ne.s32.totalorder %s86, %s87
      %p96 = scmp.eq.s32.totalorder %s20, 0
      %p97 = por %p95, %p96
      %p98 = scmp.ne.s32.totalorder %s86, %s87
      %p99 = scmp.eq.s32.totalorder %s21, 1
      %p100 = por %p98, %p99
      %p102 = scmp.ne.s32.totalorder %s87, %s101
      %p103 = scmp.eq.s32.totalorder %s21, 0
      %p104 = por %p102, %p103
      %s106 = sadd.s32 %s105, 1
      %p109 = scmp.eq.s32.totalorder %s15, 1
      %p110 = scmp.ne.s32.totalorder %s105, %s107
      %p111 = scmp.eq.s32.totalorder %s15, 0
      %p112 = por %p110, %p111
      %p113 = scmp.ne.s32.totalorder %s105, %s107
      %p114 = scmp.eq.s32.totalorder %s20, 1
      %p115 = por %p113, %p114
      %p116 = scmp.ne.s32.totalorder %s107, %s108
      %p117 = scmp.eq.s32.totalorder %s20, 0
      %p118 = por %p116, %p117
      %p119 = scmp.ne.s32.totalorder %s107, %s108
      %p120 = scmp.eq.s32.totalorder %s21, 1
      %p121 = por %p119, %p120
      %p123 = scmp.ne.s32.totalorder %s108, %s122
      %p124 = scmp.eq.s32.totalorder %s21, 0
      %p125 = por %p123, %p124
      %s127 = sadd.s32 %s126, 1
      %p130 = scmp.eq.s32.totalorder %s15, 1
      %p131 = scmp.ne.s32.totalorder %s126, %s128
      %p132 = scmp.eq.s32.totalorder %s15, 0
      %p133 = por %p131, %p132
      %p134 = scmp.ne.s32.totalorder %s126, %s128
      %p135 = scmp.eq.s32.totalorder %s20, 1
      %p136 = por %p134, %p135
      %p137 = scmp.ne.s32.totalorder %s128, %s129
      %p138 = scmp.eq.s32.totalorder %s20, 0
      %p139 = por %p137, %p138
      %p140 = scmp.ne.s32.totalorder %s128, %s129
      %p141 = scmp.eq.s32.totalorder %s21, 1
      %p142 = por %p140, %p141
      %p144 = scmp.ne.s32.totalorder %s129, %s143
      %p145 = scmp.eq.s32.totalorder %s21, 0
      %p146 = por %p144, %p145
      %s147 = ssub.s32 %s22, %s34
      %s148 = ssub.s32 %s23, %s30
      %s149 = sor.u32 %s147, %s148
      %p150 = scmp.eq.s32.totalorder %s149, 0
      %s152 = sadd.s32 %s151, 1
      %s153 = scalar_select %p150, %s151, %s152
      %p156 = pneg %p150
      %p157 = scmp.eq.s32.totalorder %s15, 1
      %p158 = por %p156, %p157
      %p159 = scmp.ne.s32.totalorder %s151, %s154
      %p160 = scmp.eq.s32.totalorder %s15, 0
      %p161 = por %p159, %p160
      %p162 = scmp.ne.s32.totalorder %s151, %s154
      %p163 = scmp.eq.s32.totalorder %s20, 1
      %p164 = por %p162, %p163
      %p165 = scmp.ne.s32.totalorder %s154, %s155
      %p166 = scmp.eq.s32.totalorder %s20, 0
      %p167 = por %p165, %p166
      %p168 = scmp.ne.s32.totalorder %s154, %s155
      %p169 = scmp.eq.s32.totalorder %s21, 1
      %p170 = por %p168, %p169
      %p172 = scmp.ne.s32.totalorder %s155, %s171
      %p173 = scmp.eq.s32.totalorder %s21, 0
      %p174 = por %p172, %p173
      %p175 = scmp.le.s32.totalorder 1, %s15
      %p176 = scmp.lt.s32.totalorder %s15, 3
      %p177 = pnand %p175, %p176
      %p178 = pneg %p177
      // Predicated region
      $region9: #{tpu_custom_call.1} parent=5 // pred_check
        _
      $region10: #{tpu_custom_call.1} parent=5 // pred_check_branch
        %180 = sbr.rel (%p177) target = $region12
      $region11: #{tpu_custom_call.1} parent=5 // pred_region
        %s181 = ssub.s32 %s15, 1
        // Predicated region
        $region13: #{tpu_custom_call.1} parent=11 // pred_check
          %p182 = pneg %p76
        $region14: #{tpu_custom_call.1} parent=11 // pred_check_branch
          %184 = sbr.rel (%p182) target = $region16
        $region15: #{tpu_custom_call.1} parent=11 // pred_region
          %s186 = ssub.s32 128, 128
          %187 = vsyncadd [#allocation3], %s186
          %s189 = sshll.u32 [#allocation2], 4
          %s190 = int_to_ptr.vmem [resolvable:$true] %s189
          %192 = dma.hbm_to_vmem [thread:$0]  %s1, 128, %s190, [#allocation3]
        $region16: #{tpu_custom_call.1} parent=11 // pred_fallthru
          _
        // Predicated region
        $region17: #{tpu_custom_call.1} parent=11 // pred_check
          %p193 = pneg %p97
        $region18: #{tpu_custom_call.1} parent=11 // pred_check_branch
          %195 = sbr.rel (%p193) target = $region20
        $region19: #{tpu_custom_call.1} parent=11 // pred_region
          _
        $region20: #{tpu_custom_call.1} parent=11 // pred_fallthru
          _
        // Predicated region
        $region21: #{tpu_custom_call.1} parent=11 // pred_check
          %p196 = pneg %p118
        $region22: #{tpu_custom_call.1} parent=11 // pred_check_branch
          %198 = sbr.rel (%p196) target = $region24
        $region23: #{tpu_custom_call.1} parent=11 // pred_region
          _
        $region24: #{tpu_custom_call.1} parent=11 // pred_fallthru
          _
        // Predicated region
        $region25: #{tpu_custom_call.1} parent=11 // pred_check
          %p199 = pneg %p139
        $region26: #{tpu_custom_call.1} parent=11 // pred_check_branch
          %201 = sbr.rel (%p199) target = $region28
        $region27: #{tpu_custom_call.1} parent=11 // pred_region
          _
        $region28: #{tpu_custom_call.1} parent=11 // pred_fallthru
          _
      $region12: #{tpu_custom_call.1} parent=5 // pred_fallthru
        _
      %p202 = scmp.lt.s32.totalorder %s15, 2
      // Predicated region
      $region29: #{tpu_custom_call.1} parent=5 // pred_check
        %p203 = pneg %p202
      $region30: #{tpu_custom_call.1} parent=5 // pred_check_branch
        %205 = sbr.rel (%p203) target = $region32
      $region31: #{tpu_custom_call.1} parent=5 // pred_region
        // Predicated region
        $region33: #{tpu_custom_call.1} parent=31 // pred_check
          %p206 = pneg %p49
        $region34: #{tpu_custom_call.1} parent=31 // pred_check_branch
          %208 = sbr.rel (%p206) target = $region36
        $region35: #{tpu_custom_call.1} parent=31 // pred_region
          %p209 = scmp.lt.s32.totalorder %s22, 1
          %s210 = scalar_select %p209, %s22, 1
          %p211 = scmp.lt.s32.totalorder %s23, 0
          %s212 = scalar_select %p211, %s23, 0
          %s213 = smul.addr %s212, 2
          %s214 = smul.addr %s210, 2
          %s215 = sadd.s32 %s213, %s214
          %s216 = smul.addr %s215, 4
          %s217 = scalar_lea.vmem %s0, %s216
        $region36: #{tpu_custom_call.1} parent=31 // pred_fallthru
          _
      $region32: #{tpu_custom_call.1} parent=5 // pred_fallthru
        _
      %p218 = scmp.le.s32.totalorder 1, %s15
      %p219 = scmp.lt.s32.totalorder %s15, 3
      %p220 = pnand %p218, %p219
      %p221 = pneg %p220
      // Predicated region
      $region37: #{tpu_custom_call.1} parent=5 // pred_check
        _
      $region38: #{tpu_custom_call.1} parent=5 // pred_check_branch
        %223 = sbr.rel (%p220) target = $region40
      $region39: #{tpu_custom_call.1} parent=5 // pred_region
        %s224 = ssub.s32 %s15, 1
        // Predicated region
        $region41: #{tpu_custom_call.1} parent=39 // pred_check
          %p225 = pneg %p76
        $region42: #{tpu_custom_call.1} parent=39 // pred_check_branch
          %227 = sbr.rel (%p225) target = $region44
        $region43: #{tpu_custom_call.1} parent=39 // pred_region
          %228 = dma.done [#allocation3], 128
        $region44: #{tpu_custom_call.1} parent=39 // pred_fallthru
          _
        %p229 = scmp.lt.s32.totalorder %s24, 1
        %s230 = scalar_select %p229, %s24, 1
        %p231 = scmp.lt.s32.totalorder %s25, 0
        %s232 = scalar_select %p231, %s25, 0
        %s233 = smul.addr %s232, 2
        %s234 = smul.addr %s230, 2
        %s235 = sadd.s32 %s233, %s234
        %s236 = smul.addr %s235, 4
        %s237 = scalar_lea.vmem %s0, %s236
        %p238 = pneg %p55
        %p239 = pneg %p52
        %p240 = pneg %p76
        %p241 = pneg %p73
        %p242 = pneg %p97
        %p243 = pneg %p94
        %p244 = pneg %p118
        %p245 = pneg %p115
        %p246 = pneg %p139
        %p247 = pneg %p136
        %p248 = pneg %p167
        %p249 = pneg %p164
        %s250 = sand.u32 %s154, 1
        %s251 = scalar_lea.sflag [#allocation4], %s250
        %s252 = sand.u32 %s154, 1
        %s253 = smul.addr %s252, 8
        %s254 = scalar_lea.vmem [#allocation5], %s253
        %p255 = scmp.lt.s32.totalorder %s24, 1
        %s256 = scalar_select %p255, %s24, 1
        %p257 = scmp.lt.s32.totalorder %s25, 0
        %s258 = scalar_select %p257, %s25, 0
        %s259 = smul.addr %s258, 2
        %s260 = smul.addr %s256, 2
        %s261 = sadd.s32 %s259, %s260
        %s262 = smul.addr %s261, 4
        %s263 = scalar_lea.vmem %s0, %s262
        %v264 = vld [vmem:[%s263] sm:$0xff]
        %v266 = vcombine.high %v264, %v264
        %v268 = vcombine.low %v264, %v264
        %269 = vrot.lane.b32.xlu0 %v268, 127
        %v270 = vpop.permute.xlu0 %269
        %271 = vrot.lane.b32.xlu0 %v264, 127
        %v272 = vpop.permute.xlu0 %271
        %vm273 = vcmask 1039360
        %v274 = vsel %vm273, %v270, %v272
        %277 = vrot.lane.b32.xlu0 %v264, 126
        %v278 = vpop.permute.xlu0 %277
        %279 = vrot.lane.b32.xlu0 %v266, 126
        %v280 = vpop.permute.xlu0 %279
        %vm281 = vcmask 1031168
        %v282 = vsel %vm281, %v278, %v280
        %vm283 = vcmask 1043456
        %v284 = vsel %vm283, %v264, %v274
        %v285 = vsel %vm283, %v266, %v272
        %v286 = vld [vmem:[#allocation2] sm:$0xff]
        %v287 = vld [vmem:[%s2] sm:$0xff]
        %289 = vset.pattern.permute.xlu0 0
        %290 = vperm.xlu0 %289, %v287
        %v291 = vpop.permute.xlu0 %290
        %vm293 = vcmask 97280
        %v295 = vsel %vm293, %v286, 0
        %v297 = vsel %vm283, %v282, 0
        %v299 = vsel %vm283, %v280, 0
        %301 = vmatprep.subr.mxu0 %v285
        %302 = vmatpush1.msra.mxu0 %v284
        %303 = vmatprep.subr.mxu0 %v299
        %304 = vmatpush1.msra.mxu0 %v297
        %305 = vmatprep.subr.mxu0 0.0
        %306 = vmatpush1.msra.mxu0 0.0
        %307 = vmatprep.subr.mxu0 0.0
        %308 = vmatpush1.msra.mxu0 0.0
        %309 = vmatprep.subr.mxu0 0.0
        %310 = vmatpush1.msra.mxu0 0.0
        %311 = vmatprep.subr.mxu0 0.0
        %312 = vmatpush1.msra.mxu0 0.0
        %313 = vmatprep.subr.mxu0 0.0
        %314 = vmatpush1.msra.mxu0 0.0
        %315 = vmatprep.subr.mxu0 0.0
        %316 = vmatpush1.msra.mxu0 0.0
        %317 = vmatprep.subr.mxu0 0.0
        %318 = vmatpush1.msra.mxu0 0.0
        %319 = vmatprep.subr.mxu0 0.0
        %320 = vmatpush1.msra.mxu0 0.0
        %321 = vmatprep.subr.mxu0 0.0
        %322 = vmatpush1.msra.mxu0 0.0
        %323 = vmatprep.subr.mxu0 0.0
        %324 = vmatpush1.msra.mxu0 0.0
        %325 = vmatprep.subr.mxu0 0.0
        %326 = vmatpush1.msra.mxu0 0.0
        %327 = vmatprep.subr.mxu0 0.0
        %328 = vmatpush1.msra.mxu0 0.0
        %329 = vmatprep.subr.mxu0 0.0
        %330 = vmatpush1.msra.mxu0 0.0
        %331 = vmatprep.subr.mxu0 0.0
        %332 = vmatpush1.msra.mxu0 0.0
        %333 = vmatprep.subr.mxu0 0.0
        %334 = vmatpush1.msra.mxu0 0.0
        %335 = vmatprep.subr.mxu0 0.0
        %336 = vmatpush1.msra.mxu0 0.0
        %337 = vmatprep.subr.mxu0 0.0
        %338 = vmatpush1.msra.mxu0 0.0
        %339 = vmatprep.subr.mxu0 0.0
        %340 = vmatpush1.msra.mxu0 0.0
        %341 = vmatprep.subr.mxu0 0.0
        %342 = vmatpush1.msra.mxu0 0.0
        %343 = vmatprep.subr.mxu0 0.0
        %344 = vmatpush1.msra.mxu0 0.0
        %345 = vmatprep.subr.mxu0 0.0
        %346 = vmatpush1.msra.mxu0 0.0
        %347 = vmatprep.subr.mxu0 0.0
        %348 = vmatpush1.msra.mxu0 0.0
        %349 = vmatprep.subr.mxu0 0.0
        %350 = vmatpush1.msra.mxu0 0.0
        %351 = vmatprep.subr.mxu0 0.0
        %352 = vmatpush1.msra.mxu0 0.0
        %353 = vmatprep.subr.mxu0 0.0
        %354 = vmatpush1.msra.mxu0 0.0
        %355 = vmatprep.subr.mxu0 0.0
        %356 = vmatpush1.msra.mxu0 0.0
        %357 = vmatprep.subr.mxu0 0.0
        %358 = vmatpush1.msra.mxu0 0.0
        %359 = vmatprep.subr.mxu0 0.0
        %360 = vmatpush1.msra.mxu0 0.0
        %361 = vmatprep.subr.mxu0 0.0
        %362 = vmatpush1.msra.mxu0 0.0
        %363 = vmatprep.subr.mxu0 0.0
        %364 = vmatpush1.msra.mxu0 0.0
        %365 = vmatprep.mubr.f32.mxu0 0.0
        %366 = vmatmul.mubr.f32.gmra.mrb[0].mxu0 %v295
        %v367 = vpop.f32.mrb[0].mxu0
        %v368 = vadd.f32 %v291, %v367
        %v369 = vpop.f32.mrb[0].mxu0
        %v370 = vadd.f32 %v291, %v369
        %371 = vdwg.mxu0
        %v372 = vmax.f32 %v368, 0.0
        %v373 = vmax.f32 %v370, 0.0
        %s374 = smul.u32 %s25, 128
        %s375 = ssub.s32 %s374, 1
        %v376 = vlaneseq
        %v377 = vand.u32 %v376, 127
        %v378 = vadd.s32 %v377, 128
        %v379 = vstv %s375
        %v380 = vadd.s32 %v379, %v377
        %v381 = vadd.s32 %v379, %v378
        %vm382 = vcmp.ge.s32.totalorder %v380, 0
        %vm383 = vcmp.ge.s32.totalorder %v381, 0
        %vm384 = vcmp.lt.s32.totalorder %v380, 16
        %vm385 = vcmp.lt.s32.totalorder %v381, 16
        %vm386 = vmand %vm382, %vm384
        %vm387 = vmand %vm383, %vm385
        %v388 = vsel %vm386, 1, 0
        %v389 = vsel %vm387, 1, 0
        %vm390 = vcmp.eq.s32.totalorder %v388, 1
        %vm391 = vcmp.eq.s32.totalorder %v389, 1
        %v392 = vsel %vm390, %v372, 0.0
        %v393 = vsel %vm391, %v373, 0.0
        %396 = vrot.lane.b32.xlu0 %v392, 127
        %v397 = vpop.permute.xlu0 %396
        %398 = vrot.lane.b32.xlu0 %v393, 127
        %v399 = vpop.permute.xlu0 %398
        %v400 = vsel %vm273, %v397, %v399
        %402 = vrot.lane.b32.xlu0 %v392, 126
        %v403 = vpop.permute.xlu0 %402
        %404 = vrot.lane.b32.xlu0 %v393, 126
        %v405 = vpop.permute.xlu0 %404
        %v406 = vsel %vm281, %v403, %v405
        %v408 = vld [vmem:[%s3] sm:$0xff]
        %v409 = vld [vmem:[%s4] sm:$0xff]
        %411 = vset.pattern.permute.xlu0 0
        %412 = vperm.xlu0 %411, %v409
        %v413 = vpop.permute.xlu0 %412
        %vm415 = vcmask 195584
        %v417 = vsel %vm415, %v408, 0
        %419 = vmatprep.subr.mxu0 0.0
        %420 = vmatpush1.msra.mxu0 %v392
        %421 = vmatprep.subr.mxu0 0.0
        %422 = vmatpush1.msra.mxu0 %v400
        %423 = vmatprep.subr.mxu0 0.0
        %424 = vmatpush1.msra.mxu0 %v406
        %425 = vmatprep.subr.mxu0 0.0
        %426 = vmatpush1.msra.mxu0 0.0
        %427 = vmatprep.subr.mxu0 0.0
        %428 = vmatpush1.msra.mxu0 0.0
        %429 = vmatprep.subr.mxu0 0.0
        %430 = vmatpush1.msra.mxu0 0.0
        %431 = vmatprep.subr.mxu0 0.0
        %432 = vmatpush1.msra.mxu0 0.0
        %433 = vmatprep.subr.mxu0 0.0
        %434 = vmatpush1.msra.mxu0 0.0
        %435 = vmatprep.subr.mxu0 0.0
        %436 = vmatpush1.msra.mxu0 0.0
        %437 = vmatprep.subr.mxu0 0.0
        %438 = vmatpush1.msra.mxu0 0.0
        %439 = vmatprep.subr.mxu0 0.0
        %440 = vmatpush1.msra.mxu0 0.0
        %441 = vmatprep.subr.mxu0 0.0
        %442 = vmatpush1.msra.mxu0 0.0
        %443 = vmatprep.subr.mxu0 0.0
        %444 = vmatpush1.msra.mxu0 0.0
        %445 = vmatprep.subr.mxu0 0.0
        %446 = vmatpush1.msra.mxu0 0.0
        %447 = vmatprep.subr.mxu0 0.0
        %448 = vmatpush1.msra.mxu0 0.0
        %449 = vmatprep.subr.mxu0 0.0
        %450 = vmatpush1.msra.mxu0 0.0
        %451 = vmatprep.subr.mxu0 0.0
        %452 = vmatpush1.msra.mxu0 0.0
        %453 = vmatprep.subr.mxu0 0.0
        %454 = vmatpush1.msra.mxu0 0.0
        %455 = vmatprep.subr.mxu0 0.0
        %456 = vmatpush1.msra.mxu0 0.0
        %457 = vmatprep.subr.mxu0 0.0
        %458 = vmatpush1.msra.mxu0 0.0
        %459 = vmatprep.subr.mxu0 0.0
        %460 = vmatpush1.msra.mxu0 0.0
        %461 = vmatprep.subr.mxu0 0.0
        %462 = vmatpush1.msra.mxu0 0.0
        %463 = vmatprep.subr.mxu0 0.0
        %464 = vmatpush1.msra.mxu0 0.0
        %465 = vmatprep.subr.mxu0 0.0
        %466 = vmatpush1.msra.mxu0 0.0
        %467 = vmatprep.subr.mxu0 0.0
        %468 = vmatpush1.msra.mxu0 0.0
        %469 = vmatprep.subr.mxu0 0.0
        %470 = vmatpush1.msra.mxu0 0.0
        %471 = vmatprep.subr.mxu0 0.0
        %472 = vmatpush1.msra.mxu0 0.0
        %473 = vmatprep.subr.mxu0 0.0
        %474 = vmatpush1.msra.mxu0 0.0
        %475 = vmatprep.subr.mxu0 0.0
        %476 = vmatpush1.msra.mxu0 0.0
        %477 = vmatprep.subr.mxu0 0.0
        %478 = vmatpush1.msra.mxu0 0.0
        %479 = vmatprep.subr.mxu0 0.0
        %480 = vmatpush1.msra.mxu0 0.0
        %481 = vmatprep.subr.mxu0 0.0
        %482 = vmatpush1.msra.mxu0 0.0
        %483 = vmatprep.mubr.f32.mxu0 0.0
        %484 = vmatmul.mubr.f32.gmra.mrb[0].mxu0 %v417
        %v485 = vpop.f32.mrb[0].mxu0
        %v486 = vadd.f32 %v413, %v485
        %v487 = vpop.f32.mrb[0].mxu0
        %488 = vdwg.mxu0
        %v489 = vmax.f32 %v486, 0.0
        %490 = vst [vmem:[%s254] sm:$0xff] %v489
        %s491 = sand.u32 %s154, 1
        %s492 = scalar_lea.sflag [#allocation4], %s491
        %s493 = sand.u32 %s154, 1
        %s494 = smul.addr %s493, 8
        %s495 = scalar_lea.vmem [#allocation5], %s494
        // Predicated region
        $region45: #{tpu_custom_call.1} parent=39 // pred_check
          %p496 = pneg %p164
        $region46: #{tpu_custom_call.1} parent=39 // pred_check_branch
          %498 = sbr.rel (%p496) target = $region48
        $region47: #{tpu_custom_call.1} parent=39 // pred_region
          %s500 = ssub.s32 128, 128
          %501 = vsyncadd %s492, %s500
          %s502 = sadd.s32 %s25, %s24
          %s503 = smul.addr %s502, 128
          %s504 = scalar_lea.hbm %s5, %s503
          %s506 = sshll.u32 %s495, 4
          %s507 = int_to_ptr.vmem [resolvable:$true] %s506
          %509 = dma.vmem_to_hbm [thread:$0]  %s507, 128, %s504, %s492
        $region48: #{tpu_custom_call.1} parent=39 // pred_fallthru
          _
      $region40: #{tpu_custom_call.1} parent=5 // pred_fallthru
        _
      %p510 = scmp.le.s32.totalorder 2, %s15
      // Predicated region
      $region49: #{tpu_custom_call.1} parent=5 // pred_check
        %p511 = pneg %p510
      $region50: #{tpu_custom_call.1} parent=5 // pred_check_branch
        %513 = sbr.rel (%p511) target = $region52
      $region51: #{tpu_custom_call.1} parent=5 // pred_region
        %s514 = ssub.s32 %s15, 2
        // Predicated region
        $region53: #{tpu_custom_call.1} parent=51 // pred_check
          %p515 = pneg %p170
        $region54: #{tpu_custom_call.1} parent=51 // pred_check_branch
          %517 = sbr.rel (%p515) target = $region56
        $region55: #{tpu_custom_call.1} parent=51 // pred_region
          %s518 = sand.u32 %s155, 1
          %s519 = scalar_lea.sflag [#allocation4], %s518
          %s520 = sand.u32 %s155, 1
          %s521 = smul.addr %s520, 8
          %s522 = scalar_lea.vmem [#allocation5], %s521
          %523 = dma.done %s519, 128
        $region56: #{tpu_custom_call.1} parent=51 // pred_fallthru
          _
      $region52: #{tpu_custom_call.1} parent=5 // pred_fallthru
        _
    $region6: #{tpu_custom_call.1} parent=1 // loop_footer
      %s19 = sadd.s32 1, %s15
    $region7: #{tpu_custom_call.1} parent=1 // loop_footer_branch
      %14 = sbr.rel target = $region3
    $region8: #{tpu_custom_call.1} parent=1 // loop_exit
      _
    %524 = vsyncpa [#allocation3], 1
    %s525 = scalar_lea.sflag [#allocation3], 1
    %526 = vsyncpa %s525, 1
    %527 = vsyncpa [#allocation4], 1
    %s528 = scalar_lea.sflag [#allocation4], 1
    %529 = vsyncpa %s528, 1

</llo_original>
